<compile_context>
chip_gen: v7x
topology: tpu7x:2x2x1
jax: 0.10.0
libtpu: 0.0.40
codegen_flags: <defaults>
</compile_context>

<pallas_src>
import functools

import jax
import jax.numpy as jnp
from jax.experimental import pallas as pl
from jax.experimental.pallas import tpu as pltpu

_LN_EPS = 1e-5
_INV_SQRT2 = 0.7071067811865476


def _round_up(x, m):
    return (x + m - 1) // m * m


def _mlp_proj_kernel(x_ref, w1_ref, b1_ref, w2_ref, c_ref, o_ref, *, use_tanh_gelu):
    # Per-tile cast of x to the matmul dtype. This is a VPU op hidden under the
    # MXU pass; no casted/padded copy of x is ever materialized in HBM.
    x = x_ref[...].astype(w1_ref.dtype)

    # ---- Linear 1: bf16 x bf16 -> f32 accumulate on the MXU.
    h = jnp.dot(x, w1_ref[...], preferred_element_type=jnp.float32)
    h = h + b1_ref[...]

    # ---- GELU. Exact erf matches PyTorch nn.GELU() default; tanh variant is
    # optional (goes to the EUP slot — cheaper on a VALU-bound epilogue, esp. v5e).
    if use_tanh_gelu:
        h = jax.nn.gelu(h, approximate=True)
    else:
        h = 0.5 * h * (1.0 + jax.lax.erf(h * _INV_SQRT2))
    # NOTE(v5e): if vld/vst slots saturate, this epilogue could be processed in
    # 128-row sub-chunks (lax.fori_loop, unroll=True) to bound the f32 live set.

    # ---- Linear 2 (cast activations to the matmul dtype for the MXU pass).
    y = jnp.dot(h.astype(w2_ref.dtype), w2_ref[...],
                preferred_element_type=jnp.float32)

    c = c_ref[...]                      # packed (3, D_out) f32: [b2, gamma, beta]
    y = y + c[0:1, :]

    # ---- LayerNorm over the last dim. Two-pass stats (subtract mean, then
    # square) for better numerical behavior; reductions go to the XLU slot.
    inv_d = 1.0 / y.shape[-1]
    mean = jnp.sum(y, axis=-1, keepdims=True) * inv_d
    centered = y - mean
    var = jnp.sum(centered * centered, axis=-1, keepdims=True) * inv_d
    y_hat = centered * jax.lax.rsqrt(var + _LN_EPS)
    o_ref[...] = (y_hat * c[1:2, :] + c[2:3, :]).astype(o_ref.dtype)


@functools.lru_cache(maxsize=1)
def _device_limits():
    """Generation-aware (vmem_budget_bytes, default_row_tile)."""
    kind = ""
    try:
        kind = jax.devices()[0].device_kind.lower()
    except Exception:
        pass
    vmem_capacity = None
    try:
        vmem_capacity = int(pltpu.get_tpu_info().vmem_capacity_bytes)
    except Exception:
        pass
    if not vmem_capacity or vmem_capacity <= 0:
        # v5e / v6e have 128 MiB VMEM per TensorCore; v7x has 64 MiB.
        # Unknown generation -> conservative 64 MiB assumption.
        vmem_capacity = (128 << 20) if ("v5" in kind or "v6" in kind) else (64 << 20)
    # ~25% headroom for compiler-internal scratch, semaphores, pipeline state.
    vmem_budget = int(vmem_capacity * 0.75)
    # Default row tile: 512 on v6e (128 MiB VMEM + bf16 VPU); 256 elsewhere
    # (v7x: keep grid >= 2 so both TCs work under 64 MiB; v5e: bound the f32
    #  epilogue live set on its single vector-store slot).
    default_row_tile = 512 if "v6" in kind else 256
    return vmem_budget, default_row_tile


@functools.partial(
    jax.jit,
    static_argnames=("row_tile", "matmul_dtype", "vmem_budget",
                     "single_buffer_consts", "use_tanh_gelu"))
def _mlp_proj_impl(image_embeds, params, row_tile, matmul_dtype, vmem_budget,
                   single_buffer_consts, use_tanh_gelu):
    w1, b1, w2, b2, gamma, beta = (
        params["w1"], params["b1"], params["w2"], params["b2"],
        params["ln_gamma"], params["ln_beta"],
    )
    B, S, D_in = image_embeds.shape
    D_hidden = w1.shape[1]
    D_out = w2.shape[1]
    out_dtype = image_embeds.dtype
    M = B * S

    x_sz = jnp.dtype(image_embeds.dtype).itemsize
    mm_sz = jnp.dtype(matmul_dtype).itemsize
    out_sz = jnp.dtype(out_dtype).itemsize

    # Row-tile alignment: bf16 packs 16 sublanes per vreg (32 for 8-bit types);
    # also respect the input dtype's native packing.
    tm_align = max(8, (8 * 4) // mm_sz, (8 * 4) // x_sz)

    # Big tile for MXU fill, but never so big that a 2-TensorCore chip (v7x)
    # collapses to a single grid step when M spans more than one tile.
    tm = max(tm_align, min(row_tile, _round_up((M + 1) // 2, tm_align)))

    w_bytes = (D_in * D_hidden + D_hidden * D_out) * mm_sz
    # (1, D_hidden) and (3, D_out) constant blocks are sublane-padded to 8 rows.
    const_bytes = 8 * (D_hidden + D_out) * 4
    const_bufs = 1 if single_buffer_consts else 2

    def vmem_needed(tm_):
        needed = (2 * tm_ * D_in * x_sz              # double-buffered x tile
                  + 2 * tm_ * D_out * out_sz         # double-buffered out tile
                  + const_bufs * (w_bytes + const_bytes)
                  + tm_ * D_in * mm_sz               # x cast to matmul dtype
                  + tm_ * D_hidden * (4 + mm_sz)     # f32 h + bf16 h
                  + 2 * tm_ * D_out * 4)             # f32 y + normalized y
        return int(needed * 1.2)                     # compiler-scratch headroom

    if tm >= M:
        tm = M                        # one full block — always layout-legal
    else:
        # Shrink the tile (not just the limit) if the footprint exceeds budget.
        while vmem_needed(tm) > vmem_budget and tm > tm_align:
            tm = max(tm_align, _round_up(tm // 2, tm_align))

    grid = (-(-M // tm),)             # ragged last tile: Pallas boundary masking
    vmem_limit = int(min(max(vmem_needed(tm), 32 << 20), vmem_budget))

    # One-time weight/constant casts (tiny HBM traffic, NOT per grid step).
    w1c = w1.astype(matmul_dtype)
    w2c = w2.astype(matmul_dtype)
    b1_2d = b1.reshape(1, D_hidden).astype(jnp.float32)
    consts = jnp.stack([b2.astype(jnp.float32),
                        gamma.astype(jnp.float32),
                        beta.astype(jnp.float32)], axis=0)      # (3, D_out)

    # x goes straight in: original dtype, original M (reshape is metadata-only).
    x2d = image_embeds.reshape(M, D_in)

    # Constant operands: single-buffer (their index_map never changes, so
    # double-buffering only wastes VMEM).
    const_kwargs = {"pipeline_mode": pl.Buffered(1)} if single_buffer_consts else {}

    cost = pl.CostEstimate(
        flops=2 * M * (D_in * D_hidden + D_hidden * D_out),
        transcendentals=M * D_hidden,
        bytes_accessed=(M * D_in * x_sz + M * D_out * out_sz
                        + w_bytes + (D_hidden + 3 * D_out) * 4),
    )

    kernel = functools.partial(_mlp_proj_kernel, use_tanh_gelu=use_tanh_gelu)

    out2d = pl.pallas_call(
        kernel,
        out_shape=jax.ShapeDtypeStruct((M, D_out), out_dtype),
        grid_spec=pltpu.PrefetchScalarGridSpec(
            num_scalar_prefetch=0,
            grid=grid,
            in_specs=[
                pl.BlockSpec((tm, D_in), lambda i: (i, 0)),                         # x rows
                pl.BlockSpec((D_in, D_hidden), lambda i: (0, 0), **const_kwargs),   # w1
                pl.BlockSpec((1, D_hidden), lambda i: (0, 0), **const_kwargs),      # b1
                pl.BlockSpec((D_hidden, D_out), lambda i: (0, 0), **const_kwargs),  # w2
                pl.BlockSpec((3, D_out), lambda i: (0, 0), **const_kwargs),         # b2/gamma/beta
            ],
            # Lane-dense output: full D_out last dim (keep D_out a multiple of
            # 128 for unmasked vector stores — true for typical projection dims).
            out_specs=pl.BlockSpec((tm, D_out), lambda i: (i, 0)),
        ),
        compiler_params=pltpu.CompilerParams(
            dimension_semantics=("parallel",),
            vmem_limit_bytes=vmem_limit,
        ),
        cost_estimate=cost,
    )(x2d, w1c, b1_2d, w2c, consts)

    return out2d.reshape(B, S, D_out)


def mlp_proj_forward(image_embeds, params, row_tile=None,
                     matmul_dtype=jnp.bfloat16, use_tanh_gelu=False):
    """image_embeds: [B, S, D_in]. Returns [B, S, D_out] in the input dtype."""
    vmem_budget, default_row_tile = _device_limits()
    rt = int(row_tile) if row_tile is not None else default_row_tile
    try:
        return _mlp_proj_impl(image_embeds, params, rt, matmul_dtype,
                              vmem_budget, True, use_tanh_gelu)
    except Exception:
        # Some JAX builds reject pl.Buffered(1); retry with default
        # (double-buffered) constant operands. Correctness unchanged.
        return _mlp_proj_impl(image_embeds, params, rt, matmul_dtype,
                              vmem_budget, False, use_tanh_gelu)


def init_params(key, clip_embeddings_dim, cross_attention_dim):
    """Deterministic synthetic params matching nn.Linear / nn.LayerNorm shapes.

    Weights stored as [in, out] (transposed vs PyTorch's [out, in])."""
    k1, k2, k3, k4 = jax.random.split(key, 4)
    s1 = 1.0 / jnp.sqrt(clip_embeddings_dim)
    w1 = jax.random.uniform(k1, (clip_embeddings_dim, clip_embeddings_dim),
                            jnp.float32, -s1, s1)
    b1 = jax.random.uniform(k2, (clip_embeddings_dim,), jnp.float32, -s1, s1)
    w2 = jax.random.uniform(k3, (clip_embeddings_dim, cross_attention_dim),
                            jnp.float32, -s1, s1)
    b2 = jax.random.uniform(k4, (cross_attention_dim,), jnp.float32, -s1, s1)
    return {
        "w1": w1, "b1": b1,
        "w2": w2, "b2": b2,
        "ln_gamma": jnp.ones((cross_attention_dim,), jnp.float32),
        "ln_beta": jnp.zeros((cross_attention_dim,), jnp.float32),
    }


def _reference_forward(x, p):
    h = x @ p["w1"] + p["b1"]
    h = jax.nn.gelu(h, approximate=False)
    y = h @ p["w2"] + p["b2"]
    mean = jnp.mean(y, axis=-1, keepdims=True)
    var = jnp.mean((y - mean) ** 2, axis=-1, keepdims=True)
    return (y - mean) * jax.lax.rsqrt(var + _LN_EPS) * p["ln_gamma"] + p["ln_beta"]


if __name__ == "__main__":
    # Small shapes consistent with the module: [B, S, clip_embeddings_dim]
    B, S = 2, 8
    clip_embeddings_dim = 256
    cross_attention_dim = 128

    key = jax.random.PRNGKey(0)
    k_params, k_x = jax.random.split(key)
    params = init_params(k_params, clip_embeddings_dim, cross_attention_dim)
    image_embeds = jax.random.normal(k_x, (B, S, clip_embeddings_dim), jnp.float32)

    out = jax.block_until_ready(mlp_proj_forward(image_embeds, params))

    ref = _reference_forward(image_embeds, params)
    assert out.shape == (B, S, cross_attention_dim)
    # bf16 matmul inputs with f32 accumulation: loosen tolerance accordingly.
    assert jnp.allclose(out, ref, atol=5e-2, rtol=5e-2), "mismatch vs JAX reference"

    print("KERNEL_OK")
</pallas_src>

<mosaic_0001>
module attributes {stable_mosaic.version = 11 : i64} {
  func.func @_mlp_proj_kernel(%arg0: i32, %arg1: memref<16x256xf32, #tpu.memory_space<vmem>>, %arg2: memref<256x256xbf16, #tpu.memory_space<vmem>>, %arg3: memref<1x256xf32, #tpu.memory_space<vmem>>, %arg4: memref<256x128xbf16, #tpu.memory_space<vmem>>, %arg5: memref<3x128xf32, #tpu.memory_space<vmem>>, %arg6: memref<16x128xf32, #tpu.memory_space<vmem>>) attributes {dimension_semantics = [#tpu.dimension_semantics<parallel>], iteration_bounds = array<i64: 1>, scalar_prefetch = 0 : i64, scratch_operands = 0 : i64, tpu.core_type = #tpu.core_type<tc>, window_params = [{transform_indices = @transform_0, window_bounds = array<i64: 16, 256>}, {pipeline_mode = #tpu.pipeline_mode<synchronous>, transform_indices = @transform_1, window_bounds = array<i64: 256, 256>}, {pipeline_mode = #tpu.pipeline_mode<synchronous>, transform_indices = @transform_2, window_bounds = array<i64: 1, 256>}, {pipeline_mode = #tpu.pipeline_mode<synchronous>, transform_indices = @transform_3, window_bounds = array<i64: 256, 128>}, {pipeline_mode = #tpu.pipeline_mode<synchronous>, transform_indices = @transform_4, window_bounds = array<i64: 3, 128>}, {transform_indices = @transform_5, window_bounds = array<i64: 16, 128>}]} {
    %c0 = arith.constant 0 : index
    %c0_0 = arith.constant 0 : index
    %0 = vector.load %arg1[%c0, %c0_0] : memref<16x256xf32, #tpu.memory_space<vmem>>, vector<16x256xf32>
    %1 = arith.truncf %0 : vector<16x256xf32> to vector<16x256xbf16>
    %c0_1 = arith.constant 0 : index
    %c0_2 = arith.constant 0 : index
    %2 = vector.load %arg2[%c0_1, %c0_2] : memref<256x256xbf16, #tpu.memory_space<vmem>>, vector<256x256xbf16>
    %cst = arith.constant dense<0.000000e+00> : vector<16x256xf32>
    %3 = tpu.matmul %1, %2, %cst {dimension_numbers = #tpu.dot_dimension_numbers<[1], [0], [0], [1], [0, 0, 1, 1], [], []>} : vector<16x256xbf16>, vector<256x256xbf16>, vector<16x256xf32> -> vector<16x256xf32>
    %c0_3 = arith.constant 0 : index
    %c0_4 = arith.constant 0 : index
    %4 = vector.load %arg3[%c0_3, %c0_4] : memref<1x256xf32, #tpu.memory_space<vmem>>, vector<1x256xf32>
    %5 = vector.broadcast %4 : vector<1x256xf32> to vector<16x256xf32>
    %6 = arith.addf %3, %5 : vector<16x256xf32>
    %cst_5 = arith.constant 5.000000e-01 : f32
    %7 = vector.broadcast %cst_5 : f32 to vector<16x256xf32>
    %8 = arith.mulf %7, %6 : vector<16x256xf32>
    %cst_6 = arith.constant 0.707106769 : f32
    %9 = vector.broadcast %cst_6 : f32 to vector<16x256xf32>
    %10 = arith.mulf %6, %9 : vector<16x256xf32>
    %11 = math.erf %10 : vector<16x256xf32>
    %cst_7 = arith.constant 1.000000e+00 : f32
    %12 = vector.broadcast %cst_7 : f32 to vector<16x256xf32>
    %13 = arith.addf %12, %11 : vector<16x256xf32>
    %14 = arith.mulf %8, %13 : vector<16x256xf32>
    %15 = arith.truncf %14 : vector<16x256xf32> to vector<16x256xbf16>
    %c0_8 = arith.constant 0 : index
    %c0_9 = arith.constant 0 : index
    %16 = vector.load %arg4[%c0_8, %c0_9] : memref<256x128xbf16, #tpu.memory_space<vmem>>, vector<256x128xbf16>
    %cst_10 = arith.constant dense<0.000000e+00> : vector<16x128xf32>
    %17 = tpu.matmul %15, %16, %cst_10 {dimension_numbers = #tpu.dot_dimension_numbers<[1], [0], [0], [1], [0, 0, 1, 1], [], []>} : vector<16x256xbf16>, vector<256x128xbf16>, vector<16x128xf32> -> vector<16x128xf32>
    %c0_11 = arith.constant 0 : index
    %c0_12 = arith.constant 0 : index
    %18 = vector.load %arg5[%c0_11, %c0_12] : memref<3x128xf32, #tpu.memory_space<vmem>>, vector<3x128xf32>
    %19 = vector.extract_strided_slice %18 {offsets = [0, 0], sizes = [1, 128], strides = [1, 1]} : vector<3x128xf32> to vector<1x128xf32>
    %20 = vector.broadcast %19 : vector<1x128xf32> to vector<16x128xf32>
    %21 = arith.addf %17, %20 : vector<16x128xf32>
    %cst_13 = arith.constant dense<0.000000e+00> : vector<16xf32>
    %22 = vector.multi_reduction <add>, %21, %cst_13 [1] : vector<16x128xf32> to vector<16xf32>
    %23 = vector.shape_cast %22 : vector<16xf32> to vector<16x1xf32>
    %cst_14 = arith.constant 7.812500e-03 : f32
    %24 = vector.broadcast %cst_14 : f32 to vector<16x1xf32>
    %25 = arith.mulf %23, %24 : vector<16x1xf32>
    %26 = vector.broadcast %25 : vector<16x1xf32> to vector<16x128xf32>
    %27 = arith.subf %21, %26 : vector<16x128xf32>
    %28 = arith.mulf %27, %27 : vector<16x128xf32>
    %cst_15 = arith.constant dense<0.000000e+00> : vector<16xf32>
    %29 = vector.multi_reduction <add>, %28, %cst_15 [1] : vector<16x128xf32> to vector<16xf32>
    %30 = vector.shape_cast %29 : vector<16xf32> to vector<16x1xf32>
    %cst_16 = arith.constant 7.812500e-03 : f32
    %31 = vector.broadcast %cst_16 : f32 to vector<16x1xf32>
    %32 = arith.mulf %30, %31 : vector<16x1xf32>
    %cst_17 = arith.constant 9.99999974E-6 : f32
    %33 = vector.broadcast %cst_17 : f32 to vector<16x1xf32>
    %34 = arith.addf %32, %33 : vector<16x1xf32>
    %35 = math.rsqrt %34 : vector<16x1xf32>
    %36 = vector.broadcast %35 : vector<16x1xf32> to vector<16x128xf32>
    %37 = arith.mulf %27, %36 : vector<16x128xf32>
    %38 = vector.extract_strided_slice %18 {offsets = [1, 0], sizes = [1, 128], strides = [1, 1]} : vector<3x128xf32> to vector<1x128xf32>
    %39 = vector.broadcast %38 : vector<1x128xf32> to vector<16x128xf32>
    %40 = arith.mulf %37, %39 : vector<16x128xf32>
    %41 = vector.extract_strided_slice %18 {offsets = [2, 0], sizes = [1, 128], strides = [1, 1]} : vector<3x128xf32> to vector<1x128xf32>
    %42 = vector.broadcast %41 : vector<1x128xf32> to vector<16x128xf32>
    %43 = arith.addf %40, %42 : vector<16x128xf32>
    %c0_18 = arith.constant 0 : index
    %c0_19 = arith.constant 0 : index
    %44 = vector.load %arg6[%c0_18, %c0_19] : memref<16x128xf32, #tpu.memory_space<vmem>>, vector<16x128xf32>
    tpu.vector_store %arg6[%c0_18, %c0_19], %43 {strides = array<i32>} : memref<16x128xf32, #tpu.memory_space<vmem>>, vector<16x128xf32>,
    return
  }
  func.func @transform_0(%arg0: i32) -> (i32, i32) {
    %c0_i32 = arith.constant 0 : i32
    %c0_i32_0 = arith.constant 0 : i32
    return %arg0, %c0_i32 : i32, i32
  }
  func.func @transform_1(%arg0: i32) -> (i32, i32) {
    %c0_i32 = arith.constant 0 : i32
    %c0_i32_0 = arith.constant 0 : i32
    %c0_i32_1 = arith.constant 0 : i32
    return %c0_i32, %c0_i32_0 : i32, i32
  }
  func.func @transform_2(%arg0: i32) -> (i32, i32) {
    %c0_i32 = arith.constant 0 : i32
    %c0_i32_0 = arith.constant 0 : i32
    %c0_i32_1 = arith.constant 0 : i32
    return %c0_i32, %c0_i32_0 : i32, i32
  }
  func.func @transform_3(%arg0: i32) -> (i32, i32) {
    %c0_i32 = arith.constant 0 : i32
    %c0_i32_0 = arith.constant 0 : i32
    %c0_i32_1 = arith.constant 0 : i32
    return %c0_i32, %c0_i32_0 : i32, i32
  }
  func.func @transform_4(%arg0: i32) -> (i32, i32) {
    %c0_i32 = arith.constant 0 : i32
    %c0_i32_0 = arith.constant 0 : i32
    %c0_i32_1 = arith.constant 0 : i32
    return %c0_i32, %c0_i32_0 : i32, i32
  }
  func.func @transform_5(%arg0: i32) -> (i32, i32) {
    %c0_i32 = arith.constant 0 : i32
    %c0_i32_0 = arith.constant 0 : i32
    return %arg0, %c0_i32 : i32, i32
  }
}

module attributes {stable_mosaic.version = 11 : i64} {
  func.func @_mlp_proj_kernel(%arg0: i32, %arg1: memref<16x256xf32, #tpu.memory_space<vmem>>, %arg2: memref<256x256xbf16, #tpu.memory_space<vmem>>, %arg3: memref<1x256xf32, #tpu.memory_space<vmem>>, %arg4: memref<256x128xbf16, #tpu.memory_space<vmem>>, %arg5: memref<3x128xf32, #tpu.memory_space<vmem>>, %arg6: memref<16x128xf32, #tpu.memory_space<vmem>>) attributes {dimension_semantics = [#tpu.dimension_semantics<parallel>], iteration_bounds = array<i64: 1>, scalar_prefetch = 0 : i64, scratch_operands = 0 : i64, tpu.core_type = #tpu.core_type<tc>, window_params = [{transform_indices = @transform_0, window_bounds = array<i64: 16, 256>}, {pipeline_mode = #tpu.pipeline_mode<synchronous>, transform_indices = @transform_1, window_bounds = array<i64: 256, 256>}, {pipeline_mode = #tpu.pipeline_mode<synchronous>, transform_indices = @transform_2, window_bounds = array<i64: 1, 256>}, {pipeline_mode = #tpu.pipeline_mode<synchronous>, transform_indices = @transform_3, window_bounds = array<i64: 256, 128>}, {pipeline_mode = #tpu.pipeline_mode<synchronous>, transform_indices = @transform_4, window_bounds = array<i64: 3, 128>}, {transform_indices = @transform_5, window_bounds = array<i64: 16, 128>}]} {
    %c0 = arith.constant 0 : index
    %c0_0 = arith.constant 0 : index
    %0 = vector.load %arg1[%c0, %c0_0] : memref<16x256xf32, #tpu.memory_space<vmem>>, vector<16x256xf32>
    %1 = arith.truncf %0 : vector<16x256xf32> to vector<16x256xbf16>
    %c0_1 = arith.constant 0 : index
    %c0_2 = arith.constant 0 : index
    %2 = vector.load %arg2[%c0_1, %c0_2] : memref<256x256xbf16, #tpu.memory_space<vmem>>, vector<256x256xbf16>
    %cst = arith.constant dense<0.000000e+00> : vector<16x256xf32>
    %3 = tpu.matmul %1, %2, %cst {dimension_numbers = #tpu.dot_dimension_numbers<[1], [0], [0], [1], [0, 0, 1, 1], [], []>} : vector<16x256xbf16>, vector<256x256xbf16>, vector<16x256xf32> -> vector<16x256xf32>
    %c0_3 = arith.constant 0 : index
    %c0_4 = arith.constant 0 : index
    %4 = vector.load %arg3[%c0_3, %c0_4] : memref<1x256xf32, #tpu.memory_space<vmem>>, vector<1x256xf32>
    %5 = vector.broadcast %4 : vector<1x256xf32> to vector<16x256xf32>
    %6 = arith.addf %3, %5 : vector<16x256xf32>
    %cst_5 = arith.constant 5.000000e-01 : f32
    %7 = vector.broadcast %cst_5 : f32 to vector<16x256xf32>
    %8 = arith.mulf %7, %6 : vector<16x256xf32>
    %cst_6 = arith.constant 0.707106769 : f32
    %9 = vector.broadcast %cst_6 : f32 to vector<16x256xf32>
    %10 = arith.mulf %6, %9 : vector<16x256xf32>
    %11 = math.erf %10 : vector<16x256xf32>
    %cst_7 = arith.constant 1.000000e+00 : f32
    %12 = vector.broadcast %cst_7 : f32 to vector<16x256xf32>
    %13 = arith.addf %12, %11 : vector<16x256xf32>
    %14 = arith.mulf %8, %13 : vector<16x256xf32>
    %15 = arith.truncf %14 : vector<16x256xf32> to vector<16x256xbf16>
    %c0_8 = arith.constant 0 : index
    %c0_9 = arith.constant 0 : index
    %16 = vector.load %arg4[%c0_8, %c0_9] : memref<256x128xbf16, #tpu.memory_space<vmem>>, vector<256x128xbf16>
    %cst_10 = arith.constant dense<0.000000e+00> : vector<16x128xf32>
    %17 = tpu.matmul %15, %16, %cst_10 {dimension_numbers = #tpu.dot_dimension_numbers<[1], [0], [0], [1], [0, 0, 1, 1], [], []>} : vector<16x256xbf16>, vector<256x128xbf16>, vector<16x128xf32> -> vector<16x128xf32>
    %c0_11 = arith.constant 0 : index
    %c0_12 = arith.constant 0 : index
    %18 = vector.load %arg5[%c0_11, %c0_12] : memref<3x128xf32, #tpu.memory_space<vmem>>, vector<3x128xf32>
    %19 = vector.extract_strided_slice %18 {offsets = [0, 0], sizes = [1, 128], strides = [1, 1]} : vector<3x128xf32> to vector<1x128xf32>
    %20 = vector.broadcast %19 : vector<1x128xf32> to vector<16x128xf32>
    %21 = arith.addf %17, %20 : vector<16x128xf32>
    %cst_13 = arith.constant dense<0.000000e+00> : vector<16xf32>
    %22 = vector.multi_reduction <add>, %21, %cst_13 [1] : vector<16x128xf32> to vector<16xf32>
    %23 = vector.shape_cast %22 : vector<16xf32> to vector<16x1xf32>
    %cst_14 = arith.constant 7.812500e-03 : f32
    %24 = vector.broadcast %cst_14 : f32 to vector<16x1xf32>
    %25 = arith.mulf %23, %24 : vector<16x1xf32>
    %26 = vector.broadcast %25 : vector<16x1xf32> to vector<16x128xf32>
    %27 = arith.subf %21, %26 : vector<16x128xf32>
    %28 = arith.mulf %27, %27 : vector<16x128xf32>
    %cst_15 = arith.constant dense<0.000000e+00> : vector<16xf32>
    %29 = vector.multi_reduction <add>, %28, %cst_15 [1] : vector<16x128xf32> to vector<16xf32>
    %30 = vector.shape_cast %29 : vector<16xf32> to vector<16x1xf32>
    %cst_16 = arith.constant 7.812500e-03 : f32
    %31 = vector.broadcast %cst_16 : f32 to vector<16x1xf32>
    %32 = arith.mulf %30, %31 : vector<16x1xf32>
    %cst_17 = arith.constant 9.99999974E-6 : f32
    %33 = vector.broadcast %cst_17 : f32 to vector<16x1xf32>
    %34 = arith.addf %32, %33 : vector<16x1xf32>
    %35 = math.rsqrt %34 : vector<16x1xf32>
    %36 = vector.broadcast %35 : vector<16x1xf32> to vector<16x128xf32>
    %37 = arith.mulf %27, %36 : vector<16x128xf32>
    %38 = vector.extract_strided_slice %18 {offsets = [1, 0], sizes = [1, 128], strides = [1, 1]} : vector<3x128xf32> to vector<1x128xf32>
    %39 = vector.broadcast %38 : vector<1x128xf32> to vector<16x128xf32>
    %40 = arith.mulf %37, %39 : vector<16x128xf32>
    %41 = vector.extract_strided_slice %18 {offsets = [2, 0], sizes = [1, 128], strides = [1, 1]} : vector<3x128xf32> to vector<1x128xf32>
    %42 = vector.broadcast %41 : vector<1x128xf32> to vector<16x128xf32>
    %43 = arith.addf %40, %42 : vector<16x128xf32>
    %c0_18 = arith.constant 0 : index
    %c0_19 = arith.constant 0 : index
    %44 = vector.load %arg6[%c0_18, %c0_19] : memref<16x128xf32, #tpu.memory_space<vmem>>, vector<16x128xf32>
    tpu.vector_store %arg6[%c0_18, %c0_19], %43 {strides = array<i32>} : memref<16x128xf32, #tpu.memory_space<vmem>>, vector<16x128xf32>,
    return
  }
  func.func @transform_0(%arg0: i32) -> (i32, i32) {
    %c0_i32 = arith.constant 0 : i32
    %c0_i32_0 = arith.constant 0 : i32
    return %arg0, %c0_i32 : i32, i32
  }
  func.func @transform_1(%arg0: i32) -> (i32, i32) {
    %c0_i32 = arith.constant 0 : i32
    %c0_i32_0 = arith.constant 0 : i32
    %c0_i32_1 = arith.constant 0 : i32
    return %c0_i32, %c0_i32_0 : i32, i32
  }
  func.func @transform_2(%arg0: i32) -> (i32, i32) {
    %c0_i32 = arith.constant 0 : i32
    %c0_i32_0 = arith.constant 0 : i32
    %c0_i32_1 = arith.constant 0 : i32
    return %c0_i32, %c0_i32_0 : i32, i32
  }
  func.func @transform_3(%arg0: i32) -> (i32, i32) {
    %c0_i32 = arith.constant 0 : i32
    %c0_i32_0 = arith.constant 0 : i32
    %c0_i32_1 = arith.constant 0 : i32
    return %c0_i32, %c0_i32_0 : i32, i32
  }
  func.func @transform_4(%arg0: i32) -> (i32, i32) {
    %c0_i32 = arith.constant 0 : i32
    %c0_i32_0 = arith.constant 0 : i32
    %c0_i32_1 = arith.constant 0 : i32
    return %c0_i32, %c0_i32_0 : i32, i32
  }
  func.func @transform_5(%arg0: i32) -> (i32, i32) {
    %c0_i32 = arith.constant 0 : i32
    %c0_i32_0 = arith.constant 0 : i32
    return %arg0, %c0_i32 : i32, i32
  }
}

</mosaic_0001>

<llo_original>
// kernel: _mlp_proj_impl.1
$region0: #{_mlp_proj_impl.1}
  #allocation0 [shape = 'u32[]', space=smem, size = 0x4, offset = 0x4, fixed_abs, tag = 'smem constant byte address 0x4 - core index']
  #allocation1 [shape = 'u32[144,128]{1,0:T(1,128)}', space=vmem, size = 0x12000, scoped, tag = 'internal scratch']
  %s0 = inlined_call_operand.vmem [shape: f32[16,256], index: 0, kind: input, shape index: {}]
  %s1 = inlined_call_operand.vmem [shape: bf16[256,256], index: 1, kind: input, shape index: {}]
  %s2 = inlined_call_operand.vmem [shape: f32[1,256], index: 2, kind: input, shape index: {}]
  %s3 = inlined_call_operand.vmem [shape: bf16[256,128], index: 3, kind: input, shape index: {}]
  %s4 = inlined_call_operand.vmem [shape: f32[3,128], index: 4, kind: input, shape index: {}]
  %s5 = inlined_call_operand.hbm [shape: f32[16,128], index: 5, kind: output, shape index: {}]
  %s6 = sld [smem:[#allocation0]]
  $region30: #{_mlp_proj_impl.1} parent=0
    _
  %s8 = ssub.s32 1, %s6
  %s9 = scalar_select 0, %s8, %s6
  $region1: #{_mlp_proj_impl.1} parent=0
    #allocation2 [shape = 'u8[8192]{0}', space=vmem, size = 0x2000, scoped, tag = 'output window, operand 0, single buffered']
    #allocation3 [shape = 's32[1]{0}', space=sflag, size = 0x4, scoped, tag = 'scoped memory for _mlp_proj_impl.1']
    %10 = vsyncpa [#allocation3], 0
    // Predicated region
    $region2: #{_mlp_proj_impl.1} parent=1 // pred_check
      _
    $region3: #{_mlp_proj_impl.1} parent=1 // pred_check_branch
      %12 = sbr.rel (0) target = $region5
    $region4: #{_mlp_proj_impl.1} parent=1 // pred_region
      _
    $region5: #{_mlp_proj_impl.1} parent=1 // pred_fallthru
      _
    // Predicated region
    $region6: #{_mlp_proj_impl.1} parent=1 // pred_check
      _
    $region7: #{_mlp_proj_impl.1} parent=1 // pred_check_branch
      %14 = sbr.rel (0) target = $region9
    $region8: #{_mlp_proj_impl.1} parent=1 // pred_region
      _
    $region9: #{_mlp_proj_impl.1} parent=1 // pred_fallthru
      _
    // Predicated region
    $region10: #{_mlp_proj_impl.1} parent=1 // pred_check
      _
    $region11: #{_mlp_proj_impl.1} parent=1 // pred_check_branch
      %16 = sbr.rel (0) target = $region13
    $region12: #{_mlp_proj_impl.1} parent=1 // pred_region
      _
    $region13: #{_mlp_proj_impl.1} parent=1 // pred_fallthru
      _
    // Predicated region
    $region14: #{_mlp_proj_impl.1} parent=1 // pred_check
      _
    $region15: #{_mlp_proj_impl.1} parent=1 // pred_check_branch
      %18 = sbr.rel (0) target = $region17
    $region16: #{_mlp_proj_impl.1} parent=1 // pred_region
      _
    $region17: #{_mlp_proj_impl.1} parent=1 // pred_fallthru
      _
    // Predicated region
    $region18: #{_mlp_proj_impl.1} parent=1 // pred_check
      _
    $region19: #{_mlp_proj_impl.1} parent=1 // pred_check_branch
      %20 = sbr.rel (0) target = $region21
    $region20: #{_mlp_proj_impl.1} parent=1 // pred_region
      _
    $region21: #{_mlp_proj_impl.1} parent=1 // pred_fallthru
      _
    %v22 = vld [vmem:[%s0] sm:$0xff]
    %v23 = vld [vmem:[%s0 + $0x8] sm:$0xff]
    %v24 = vld [vmem:[%s0 + $0x10] sm:$0xff]
    %v25 = vld [vmem:[%s0 + $0x18] sm:$0xff]
    %v26 = vpack.c.bf16 %v24, %v22
    %v27 = vpack.c.bf16 %v25, %v23
    %v28 = vld [vmem:[%s1] sm:$0xff]
    %v29 = vld [vmem:[%s1 + $0x8] sm:$0xff]
    %v30 = vld [vmem:[%s1 + $0x10] sm:$0xff]
    %v31 = vld [vmem:[%s1 + $0x18] sm:$0xff]
    %v32 = vld [vmem:[%s1 + $0x20] sm:$0xff]
    %v33 = vld [vmem:[%s1 + $0x28] sm:$0xff]
    %v34 = vld [vmem:[%s1 + $0x30] sm:$0xff]
    %v35 = vld [vmem:[%s1 + $0x38] sm:$0xff]
    %v36 = vld [vmem:[%s1 + $0x40] sm:$0xff]
    %v37 = vld [vmem:[%s1 + $0x48] sm:$0xff]
    %v38 = vld [vmem:[%s1 + $0x50] sm:$0xff]
    %v39 = vld [vmem:[%s1 + $0x58] sm:$0xff]
    %v40 = vld [vmem:[%s1 + $0x60] sm:$0xff]
    %v41 = vld [vmem:[%s1 + $0x68] sm:$0xff]
    %v42 = vld [vmem:[%s1 + $0x70] sm:$0xff]
    %v43 = vld [vmem:[%s1 + $0x78] sm:$0xff]
    %v44 = vld [vmem:[%s1 + $0x80] sm:$0xff]
    %v45 = vld [vmem:[%s1 + $0x88] sm:$0xff]
    %v46 = vld [vmem:[%s1 + $0x90] sm:$0xff]
    %v47 = vld [vmem:[%s1 + $0x98] sm:$0xff]
    %v48 = vld [vmem:[%s1 + $0xa0] sm:$0xff]
    %v49 = vld [vmem:[%s1 + $0xa8] sm:$0xff]
    %v50 = vld [vmem:[%s1 + $0xb0] sm:$0xff]
    %v51 = vld [vmem:[%s1 + $0xb8] sm:$0xff]
    %v52 = vld [vmem:[%s1 + $0xc0] sm:$0xff]
    %v53 = vld [vmem:[%s1 + $0xc8] sm:$0xff]
    %v54 = vld [vmem:[%s1 + $0xd0] sm:$0xff]
    %v55 = vld [vmem:[%s1 + $0xd8] sm:$0xff]
    %v56 = vld [vmem:[%s1 + $0xe0] sm:$0xff]
    %v57 = vld [vmem:[%s1 + $0xe8] sm:$0xff]
    %v58 = vld [vmem:[%s1 + $0xf0] sm:$0xff]
    %v59 = vld [vmem:[%s1 + $0xf8] sm:$0xff]
    %v60 = vld [vmem:[%s2] sm:$0x3]
    %v62 = vlaneseq
    %v63 = vshrl.u32 %v62, 7
    %v64 = vsub.s32 0, %v63
    %v65 = vrot.slane %v60, %v64
    %v66 = vlaneseq
    %v67 = vshrl.u32 %v66, 7
    %v68 = vsub.s32 1, %v67
    %v69 = vrot.slane %v60, %v68
    %v104 = vunpack.c.l.b16 %v28
    %v105 = vunpack.c.h.b16 %v28
    %v106 = vunpack.c.l.b16 %v29
    %v107 = vunpack.c.h.b16 %v29
    %v108 = vunpack.c.l.b16 %v30
    %v109 = vunpack.c.h.b16 %v30
    %v110 = vunpack.c.l.b16 %v31
    %v111 = vunpack.c.h.b16 %v31
    %v112 = vunpack.c.l.b16 %v32
    %v113 = vunpack.c.h.b16 %v32
    %v114 = vunpack.c.l.b16 %v33
    %v115 = vunpack.c.h.b16 %v33
    %v116 = vunpack.c.l.b16 %v34
    %v117 = vunpack.c.h.b16 %v34
    %v118 = vunpack.c.l.b16 %v35
    %v119 = vunpack.c.h.b16 %v35
    %v120 = vunpack.c.l.b16 %v36
    %v121 = vunpack.c.h.b16 %v36
    %v122 = vunpack.c.l.b16 %v37
    %v123 = vunpack.c.h.b16 %v37
    %v124 = vunpack.c.l.b16 %v38
    %v125 = vunpack.c.h.b16 %v38
    %v126 = vunpack.c.l.b16 %v39
    %v127 = vunpack.c.h.b16 %v39
    %v128 = vunpack.c.l.b16 %v40
    %v129 = vunpack.c.h.b16 %v40
    %v130 = vunpack.c.l.b16 %v41
    %v131 = vunpack.c.h.b16 %v41
    %v132 = vunpack.c.l.b16 %v42
    %v133 = vunpack.c.h.b16 %v42
    %v134 = vunpack.c.l.b16 %v43
    %v135 = vunpack.c.h.b16 %v43
    %v136 = vunpack.c.l.b16 %v44
    %v137 = vunpack.c.h.b16 %v44
    %v138 = vunpack.c.l.b16 %v45
    %v139 = vunpack.c.h.b16 %v45
    %v140 = vunpack.c.l.b16 %v46
    %v141 = vunpack.c.h.b16 %v46
    %v142 = vunpack.c.l.b16 %v47
    %v143 = vunpack.c.h.b16 %v47
    %v144 = vunpack.c.l.b16 %v48
    %v145 = vunpack.c.h.b16 %v48
    %v146 = vunpack.c.l.b16 %v49
    %v147 = vunpack.c.h.b16 %v49
    %v148 = vunpack.c.l.b16 %v50
    %v149 = vunpack.c.h.b16 %v50
    %v150 = vunpack.c.l.b16 %v51
    %v151 = vunpack.c.h.b16 %v51
    %v152 = vunpack.c.l.b16 %v52
    %v153 = vunpack.c.h.b16 %v52
    %v154 = vunpack.c.l.b16 %v53
    %v155 = vunpack.c.h.b16 %v53
    %v156 = vunpack.c.l.b16 %v54
    %v157 = vunpack.c.h.b16 %v54
    %v158 = vunpack.c.l.b16 %v55
    %v159 = vunpack.c.h.b16 %v55
    %v160 = vunpack.c.l.b16 %v56
    %v161 = vunpack.c.h.b16 %v56
    %v162 = vunpack.c.l.b16 %v57
    %v163 = vunpack.c.h.b16 %v57
    %v164 = vunpack.c.l.b16 %v58
    %v165 = vunpack.c.h.b16 %v58
    %v166 = vunpack.c.l.b16 %v59
    %v167 = vunpack.c.h.b16 %v59
    %v168 = vpack.c.b16 %v106, %v104
    %v169 = vpack.c.b16 %v107, %v105
    %v170 = vpack.c.b16 %v110, %v108
    %v171 = vpack.c.b16 %v111, %v109
    %v172 = vpack.c.b16 %v114, %v112
    %v173 = vpack.c.b16 %v115, %v113
    %v174 = vpack.c.b16 %v118, %v116
    %v175 = vpack.c.b16 %v119, %v117
    %v176 = vpack.c.b16 %v122, %v120
    %v177 = vpack.c.b16 %v123, %v121
    %v178 = vpack.c.b16 %v126, %v124
    %v179 = vpack.c.b16 %v127, %v125
    %v180 = vpack.c.b16 %v130, %v128
    %v181 = vpack.c.b16 %v131, %v129
    %v182 = vpack.c.b16 %v134, %v132
    %v183 = vpack.c.b16 %v135, %v133
    %v184 = vpack.c.b16 %v138, %v136
    %v185 = vpack.c.b16 %v139, %v137
    %v186 = vpack.c.b16 %v142, %v140
    %v187 = vpack.c.b16 %v143, %v141
    %v188 = vpack.c.b16 %v146, %v144
    %v189 = vpack.c.b16 %v147, %v145
    %v190 = vpack.c.b16 %v150, %v148
    %v191 = vpack.c.b16 %v151, %v149
    %v192 = vpack.c.b16 %v154, %v152
    %v193 = vpack.c.b16 %v155, %v153
    %v194 = vpack.c.b16 %v158, %v156
    %v195 = vpack.c.b16 %v159, %v157
    %v196 = vpack.c.b16 %v162, %v160
    %v197 = vpack.c.b16 %v163, %v161
    %v198 = vpack.c.b16 %v166, %v164
    %v199 = vpack.c.b16 %v167, %v165
    %232 = vmatprep.subr.bf16.mxu0 %v169
    %233 = vmatpush1.bf16.msra.mxu0 %v168
    %234 = vmatprep.subr.bf16.mxu0 %v171
    %235 = vmatpush1.bf16.msra.mxu0 %v170
    %236 = vmatprep.subr.bf16.mxu0 %v173
    %237 = vmatpush1.bf16.msra.mxu0 %v172
    %238 = vmatprep.subr.bf16.mxu0 %v175
    %239 = vmatpush1.bf16.msra.mxu0 %v174
    %240 = vmatprep.subr.bf16.mxu0 %v177
    %241 = vmatpush1.bf16.msra.mxu0 %v176
    %242 = vmatprep.subr.bf16.mxu0 %v179
    %243 = vmatpush1.bf16.msra.mxu0 %v178
    %244 = vmatprep.subr.bf16.mxu0 %v181
    %245 = vmatpush1.bf16.msra.mxu0 %v180
    %246 = vmatprep.subr.bf16.mxu0 %v183
    %247 = vmatpush1.bf16.msra.mxu0 %v182
    %248 = vmatprep.subr.bf16.mxu0 %v185
    %249 = vmatpush1.bf16.msra.mxu0 %v184
    %250 = vmatprep.subr.bf16.mxu0 %v187
    %251 = vmatpush1.bf16.msra.mxu0 %v186
    %252 = vmatprep.subr.bf16.mxu0 %v189
    %253 = vmatpush1.bf16.msra.mxu0 %v188
    %254 = vmatprep.subr.bf16.mxu0 %v191
    %255 = vmatpush1.bf16.msra.mxu0 %v190
    %256 = vmatprep.subr.bf16.mxu0 %v193
    %257 = vmatpush1.bf16.msra.mxu0 %v192
    %258 = vmatprep.subr.bf16.mxu0 %v195
    %259 = vmatpush1.bf16.msra.mxu0 %v194
    %260 = vmatprep.subr.bf16.mxu0 %v197
    %261 = vmatpush1.bf16.msra.mxu0 %v196
    %262 = vmatprep.subr.bf16.mxu0 %v199
    %263 = vmatpush1.bf16.msra.mxu0 %v198
    %264 = vmatprep.mubr.bf16.mxu0 %v27
    %265 = vmatmul.mubr.bf16.gmra.mrb[0].mxu0 %v26
    %v266 = vpop.f32.mrb[0].mxu0
    %v267 = vadd.f32 %v65, %v266
    %v268 = vpop.f32.mrb[0].mxu0
    %v269 = vadd.f32 %v69, %v268
    %v270 = vpop.f32.mrb[0].mxu0
    %v271 = vadd.f32 %v65, %v270
    %v272 = vpop.f32.mrb[0].mxu0
    %v273 = vadd.f32 %v69, %v272
    %274 = vdwg.mxu0
    %v275 = vmul.f32 %v267, 0.5
    %v276 = vmul.f32 %v269, 0.5
    %v277 = vmul.f32 %v271, 0.5
    %v278 = vmul.f32 %v273, 0.5
    %v279 = vmul.f32 %v267, 0.70710677
    %v280 = vmul.f32 %v269, 0.70710677
    %v281 = vmul.f32 %v271, 0.70710677
    %v282 = vmul.f32 %v273, 0.70710677
    %v283 = verf.f32.pop %v279
    %v284 = verf.f32.pop %v280
    %v285 = verf.f32.pop %v281
    %v286 = verf.f32.pop %v282
    %v287 = vadd.f32 %v283, 1.0
    %v288 = vadd.f32 %v284, 1.0
    %v289 = vadd.f32 %v285, 1.0
    %v290 = vadd.f32 %v286, 1.0
    %v291 = vmul.f32 %v275, %v287
    %v292 = vmul.f32 %v276, %v288
    %v293 = vmul.f32 %v277, %v289
    %v294 = vmul.f32 %v278, %v290
    %v295 = vpack.c.bf16 %v293, %v291
    %v296 = vpack.c.bf16 %v294, %v292
    %v297 = vld [vmem:[%s3] sm:$0xf]
    %v298 = vld [vmem:[%s3 + $0x4] sm:$0xf]
    %v299 = vld [vmem:[%s3 + $0x8] sm:$0xf]
    %v300 = vld [vmem:[%s3 + $0xc] sm:$0xf]
    %v301 = vld [vmem:[%s3 + $0x10] sm:$0xf]
    %v302 = vld [vmem:[%s3 + $0x14] sm:$0xf]
    %v303 = vld [vmem:[%s3 + $0x18] sm:$0xf]
    %v304 = vld [vmem:[%s3 + $0x1c] sm:$0xf]
    %v305 = vld [vmem:[%s3 + $0x20] sm:$0xf]
    %v306 = vld [vmem:[%s3 + $0x24] sm:$0xf]
    %v307 = vld [vmem:[%s3 + $0x28] sm:$0xf]
    %v308 = vld [vmem:[%s3 + $0x2c] sm:$0xf]
    %v309 = vld [vmem:[%s3 + $0x30] sm:$0xf]
    %v310 = vld [vmem:[%s3 + $0x34] sm:$0xf]
    %v311 = vld [vmem:[%s3 + $0x38] sm:$0xf]
    %v312 = vld [vmem:[%s3 + $0x3c] sm:$0xf]
    %v313 = vld [vmem:[%s3 + $0x40] sm:$0xf]
    %v314 = vld [vmem:[%s3 + $0x44] sm:$0xf]
    %v315 = vld [vmem:[%s3 + $0x48] sm:$0xf]
    %v316 = vld [vmem:[%s3 + $0x4c] sm:$0xf]
    %v317 = vld [vmem:[%s3 + $0x50] sm:$0xf]
    %v318 = vld [vmem:[%s3 + $0x54] sm:$0xf]
    %v319 = vld [vmem:[%s3 + $0x58] sm:$0xf]
    %v320 = vld [vmem:[%s3 + $0x5c] sm:$0xf]
    %v321 = vld [vmem:[%s3 + $0x60] sm:$0xf]
    %v322 = vld [vmem:[%s3 + $0x64] sm:$0xf]
    %v323 = vld [vmem:[%s3 + $0x68] sm:$0xf]
    %v324 = vld [vmem:[%s3 + $0x6c] sm:$0xf]
    %v325 = vld [vmem:[%s3 + $0x70] sm:$0xf]
    %v326 = vld [vmem:[%s3 + $0x74] sm:$0xf]
    %v327 = vld [vmem:[%s3 + $0x78] sm:$0xf]
    %v328 = vld [vmem:[%s3 + $0x7c] sm:$0xf]
    %v329 = vld [vmem:[%s4] sm:$0x7]
    %v330 = vlaneseq
    %v331 = vshrl.u32 %v330, 7
    %v332 = vsub.s32 0, %v331
    %v333 = vrot.slane %v329, %v332
    %v366 = vunpack.c.l.b16 %v297
    %v367 = vunpack.c.l.b16 %v298
    %v368 = vunpack.c.l.b16 %v299
    %v369 = vunpack.c.l.b16 %v300
    %v370 = vunpack.c.l.b16 %v301
    %v371 = vunpack.c.l.b16 %v302
    %v372 = vunpack.c.l.b16 %v303
    %v373 = vunpack.c.l.b16 %v304
    %v374 = vunpack.c.l.b16 %v305
    %v375 = vunpack.c.l.b16 %v306
    %v376 = vunpack.c.l.b16 %v307
    %v377 = vunpack.c.l.b16 %v308
    %v378 = vunpack.c.l.b16 %v309
    %v379 = vunpack.c.l.b16 %v310
    %v380 = vunpack.c.l.b16 %v311
    %v381 = vunpack.c.l.b16 %v312
    %v382 = vunpack.c.l.b16 %v313
    %v383 = vunpack.c.l.b16 %v314
    %v384 = vunpack.c.l.b16 %v315
    %v385 = vunpack.c.l.b16 %v316
    %v386 = vunpack.c.l.b16 %v317
    %v387 = vunpack.c.l.b16 %v318
    %v388 = vunpack.c.l.b16 %v319
    %v389 = vunpack.c.l.b16 %v320
    %v390 = vunpack.c.l.b16 %v321
    %v391 = vunpack.c.l.b16 %v322
    %v392 = vunpack.c.l.b16 %v323
    %v393 = vunpack.c.l.b16 %v324
    %v394 = vunpack.c.l.b16 %v325
    %v395 = vunpack.c.l.b16 %v326
    %v396 = vunpack.c.l.b16 %v327
    %v397 = vunpack.c.l.b16 %v328
    %v398 = vpack.c.b16 %v367, %v366
    %v399 = vpack.c.b16 %v369, %v368
    %v400 = vpack.c.b16 %v371, %v370
    %v401 = vpack.c.b16 %v373, %v372
    %v402 = vpack.c.b16 %v375, %v374
    %v403 = vpack.c.b16 %v377, %v376
    %v404 = vpack.c.b16 %v379, %v378
    %v405 = vpack.c.b16 %v381, %v380
    %v406 = vpack.c.b16 %v383, %v382
    %v407 = vpack.c.b16 %v385, %v384
    %v408 = vpack.c.b16 %v387, %v386
    %v409 = vpack.c.b16 %v389, %v388
    %v410 = vpack.c.b16 %v391, %v390
    %v411 = vpack.c.b16 %v393, %v392
    %v412 = vpack.c.b16 %v395, %v394
    %v413 = vpack.c.b16 %v397, %v396
    %430 = vmatprep.subr.bf16.mxu0 0
    %431 = vmatpush1.bf16.msra.mxu0 %v398
    %432 = vmatprep.subr.bf16.mxu0 0
    %433 = vmatpush1.bf16.msra.mxu0 %v399
    %434 = vmatprep.subr.bf16.mxu0 0
    %435 = vmatpush1.bf16.msra.mxu0 %v400
    %436 = vmatprep.subr.bf16.mxu0 0
    %437 = vmatpush1.bf16.msra.mxu0 %v401
    %438 = vmatprep.subr.bf16.mxu0 0
    %439 = vmatpush1.bf16.msra.mxu0 %v402
    %440 = vmatprep.subr.bf16.mxu0 0
    %441 = vmatpush1.bf16.msra.mxu0 %v403
    %442 = vmatprep.subr.bf16.mxu0 0
    %443 = vmatpush1.bf16.msra.mxu0 %v404
    %444 = vmatprep.subr.bf16.mxu0 0
    %445 = vmatpush1.bf16.msra.mxu0 %v405
    %446 = vmatprep.subr.bf16.mxu0 0
    %447 = vmatpush1.bf16.msra.mxu0 %v406
    %448 = vmatprep.subr.bf16.mxu0 0
    %449 = vmatpush1.bf16.msra.mxu0 %v407
    %450 = vmatprep.subr.bf16.mxu0 0
    %451 = vmatpush1.bf16.msra.mxu0 %v408
    %452 = vmatprep.subr.bf16.mxu0 0
    %453 = vmatpush1.bf16.msra.mxu0 %v409
    %454 = vmatprep.subr.bf16.mxu0 0
    %455 = vmatpush1.bf16.msra.mxu0 %v410
    %456 = vmatprep.subr.bf16.mxu0 0
    %457 = vmatpush1.bf16.msra.mxu0 %v411
    %458 = vmatprep.subr.bf16.mxu0 0
    %459 = vmatpush1.bf16.msra.mxu0 %v412
    %460 = vmatprep.subr.bf16.mxu0 0
    %461 = vmatpush1.bf16.msra.mxu0 %v413
    %462 = vmatprep.mubr.bf16.mxu0 %v296
    %463 = vmatmul.mubr.bf16.gmra.mrb[0].mxu0 %v295
    %v464 = vpop.f32.mrb[0].mxu0
    %v465 = vadd.f32 %v333, %v464
    %v466 = vpop.f32.mrb[0].mxu0
    %v467 = vpop.f32.mrb[0].mxu0
    %v468 = vadd.f32 %v333, %v467
    %v469 = vpop.f32.mrb[0].mxu0
    %470 = vdwg.mxu0
    %471 = vadd.xlane.f32.xlu0 %v465
    %v472 = vpop.xlane.xlu0 %471
    %473 = vadd.xlane.f32.xlu0 %v468
    %v474 = vpop.xlane.xlu0 %473
    %v475 = vmul.f32 %v472, 0.0078125
    %v476 = vmul.f32 %v474, 0.0078125
    %v477 = vsub.f32 %v465, %v475
    %v478 = vsub.f32 %v468, %v476
    %v479 = vmul.f32 %v477, %v477
    %v480 = vmul.f32 %v478, %v478
    %481 = vadd.xlane.f32.xlu0 %v479
    %v482 = vpop.xlane.xlu0 %481
    %483 = vadd.xlane.f32.xlu0 %v480
    %v484 = vpop.xlane.xlu0 %483
    %v485 = vmul.f32 %v482, 0.0078125
    %v486 = vmul.f32 %v484, 0.0078125
    %v487 = vadd.f32 %v485, 1e-05
    %v488 = vadd.f32 %v486, 1e-05
    %v489 = vrsqrt.pop %v487
    %v490 = vrsqrt.pop %v488
    %v491 = vmul.f32 %v477, %v489
    %v492 = vmul.f32 %v478, %v490
    %v493 = vlaneseq
    %v494 = vshrl.u32 %v493, 7
    %v495 = vsub.s32 1, %v494
    %v496 = vrot.slane %v329, %v495
    %v497 = vmul.f32 %v491, %v496
    %v498 = vmul.f32 %v492, %v496
    %v499 = vlaneseq
    %v500 = vshrl.u32 %v499, 7
    %v501 = vsub.s32 2, %v500
    %v502 = vrot.slane %v329, %v501
    %v503 = vadd.f32 %v497, %v502
    %v504 = vadd.f32 %v498, %v502
    %505 = vst [vmem:[#allocation2] sm:$0xff] %v503
    %506 = vst [vmem:[#allocation2 + $0x8] sm:$0xff] %v504
    // Predicated region
    $region22: #{_mlp_proj_impl.1} parent=1 // pred_check
      _
    $region23: #{_mlp_proj_impl.1} parent=1 // pred_check_branch
      %508 = sbr.rel (0) target = $region25
    $region24: #{_mlp_proj_impl.1} parent=1 // pred_region
      %s510 = ssub.s32 256, 256
      %511 = vsyncadd [#allocation3], %s510
      %s512 = sshll.u32 [#allocation2], 4
      %s513 = int_to_ptr.vmem [resolvable:$true] %s512
      %518 = dma.vmem_to_hbm [thread:$0]  %s513, 256, %s5, [#allocation3], 128, 128, 8
    $region25: #{_mlp_proj_impl.1} parent=1 // pred_fallthru
      _
    // Predicated region
    $region26: #{_mlp_proj_impl.1} parent=1 // pred_check
      _
    $region27: #{_mlp_proj_impl.1} parent=1 // pred_check_branch
      %520 = sbr.rel (0) target = $region29
    $region28: #{_mlp_proj_impl.1} parent=1 // pred_region
      %521 = dma.done [#allocation3], 256
    $region29: #{_mlp_proj_impl.1} parent=1 // pred_fallthru
      _
    %522 = vsyncpa [#allocation3], 1

// kernel: _mlp_proj_impl.1
$region0: #{_mlp_proj_impl.1}
  #allocation0 [shape = 'u32[]', space=smem, size = 0x4, offset = 0x4, fixed_abs, tag = 'smem constant byte address 0x4 - core index']
  #allocation1 [shape = 'u32[144,128]{1,0:T(1,128)}', space=vmem, size = 0x12000, scoped, tag = 'internal scratch']
  %s0 = inlined_call_operand.vmem [shape: f32[16,256], index: 0, kind: input, shape index: {}]
  %s1 = inlined_call_operand.vmem [shape: bf16[256,256], index: 1, kind: input, shape index: {}]
  %s2 = inlined_call_operand.vmem [shape: f32[1,256], index: 2, kind: input, shape index: {}]
  %s3 = inlined_call_operand.vmem [shape: bf16[256,128], index: 3, kind: input, shape index: {}]
  %s4 = inlined_call_operand.vmem [shape: f32[3,128], index: 4, kind: input, shape index: {}]
  %s5 = inlined_call_operand.hbm [shape: f32[16,128], index: 5, kind: output, shape index: {}]
  %s6 = sld [smem:[#allocation0]]
  $region30: #{_mlp_proj_impl.1} parent=0
    _
  %s8 = ssub.s32 1, %s6
  %s9 = scalar_select 0, %s8, %s6
  $region1: #{_mlp_proj_impl.1} parent=0
    #allocation2 [shape = 'u8[8192]{0}', space=vmem, size = 0x2000, scoped, tag = 'output window, operand 0, single buffered']
    #allocation3 [shape = 's32[1]{0}', space=sflag, size = 0x4, scoped, tag = 'scoped memory for _mlp_proj_impl.1']
    %10 = vsyncpa [#allocation3], 0
    // Predicated region
    $region2: #{_mlp_proj_impl.1} parent=1 // pred_check
      _
    $region3: #{_mlp_proj_impl.1} parent=1 // pred_check_branch
      %12 = sbr.rel (0) target = $region5
    $region4: #{_mlp_proj_impl.1} parent=1 // pred_region
      _
    $region5: #{_mlp_proj_impl.1} parent=1 // pred_fallthru
      _
    // Predicated region
    $region6: #{_mlp_proj_impl.1} parent=1 // pred_check
      _
    $region7: #{_mlp_proj_impl.1} parent=1 // pred_check_branch
      %14 = sbr.rel (0) target = $region9
    $region8: #{_mlp_proj_impl.1} parent=1 // pred_region
      _
    $region9: #{_mlp_proj_impl.1} parent=1 // pred_fallthru
      _
    // Predicated region
    $region10: #{_mlp_proj_impl.1} parent=1 // pred_check
      _
    $region11: #{_mlp_proj_impl.1} parent=1 // pred_check_branch
      %16 = sbr.rel (0) target = $region13
    $region12: #{_mlp_proj_impl.1} parent=1 // pred_region
      _
    $region13: #{_mlp_proj_impl.1} parent=1 // pred_fallthru
      _
    // Predicated region
    $region14: #{_mlp_proj_impl.1} parent=1 // pred_check
      _
    $region15: #{_mlp_proj_impl.1} parent=1 // pred_check_branch
      %18 = sbr.rel (0) target = $region17
    $region16: #{_mlp_proj_impl.1} parent=1 // pred_region
      _
    $region17: #{_mlp_proj_impl.1} parent=1 // pred_fallthru
      _
    // Predicated region
    $region18: #{_mlp_proj_impl.1} parent=1 // pred_check
      _
    $region19: #{_mlp_proj_impl.1} parent=1 // pred_check_branch
      %20 = sbr.rel (0) target = $region21
    $region20: #{_mlp_proj_impl.1} parent=1 // pred_region
      _
    $region21: #{_mlp_proj_impl.1} parent=1 // pred_fallthru
      _
    %v22 = vld [vmem:[%s0] sm:$0xff]
    %v23 = vld [vmem:[%s0 + $0x8] sm:$0xff]
    %v24 = vld [vmem:[%s0 + $0x10] sm:$0xff]
    %v25 = vld [vmem:[%s0 + $0x18] sm:$0xff]
    %v26 = vpack.c.bf16 %v24, %v22
    %v27 = vpack.c.bf16 %v25, %v23
    %v28 = vld [vmem:[%s1] sm:$0xff]
    %v29 = vld [vmem:[%s1 + $0x8] sm:$0xff]
    %v30 = vld [vmem:[%s1 + $0x10] sm:$0xff]
    %v31 = vld [vmem:[%s1 + $0x18] sm:$0xff]
    %v32 = vld [vmem:[%s1 + $0x20] sm:$0xff]
    %v33 = vld [vmem:[%s1 + $0x28] sm:$0xff]
    %v34 = vld [vmem:[%s1 + $0x30] sm:$0xff]
    %v35 = vld [vmem:[%s1 + $0x38] sm:$0xff]
    %v36 = vld [vmem:[%s1 + $0x40] sm:$0xff]
    %v37 = vld [vmem:[%s1 + $0x48] sm:$0xff]
    %v38 = vld [vmem:[%s1 + $0x50] sm:$0xff]
    %v39 = vld [vmem:[%s1 + $0x58] sm:$0xff]
    %v40 = vld [vmem:[%s1 + $0x60] sm:$0xff]
    %v41 = vld [vmem:[%s1 + $0x68] sm:$0xff]
    %v42 = vld [vmem:[%s1 + $0x70] sm:$0xff]
    %v43 = vld [vmem:[%s1 + $0x78] sm:$0xff]
    %v44 = vld [vmem:[%s1 + $0x80] sm:$0xff]
    %v45 = vld [vmem:[%s1 + $0x88] sm:$0xff]
    %v46 = vld [vmem:[%s1 + $0x90] sm:$0xff]
    %v47 = vld [vmem:[%s1 + $0x98] sm:$0xff]
    %v48 = vld [vmem:[%s1 + $0xa0] sm:$0xff]
    %v49 = vld [vmem:[%s1 + $0xa8] sm:$0xff]
    %v50 = vld [vmem:[%s1 + $0xb0] sm:$0xff]
    %v51 = vld [vmem:[%s1 + $0xb8] sm:$0xff]
    %v52 = vld [vmem:[%s1 + $0xc0] sm:$0xff]
    %v53 = vld [vmem:[%s1 + $0xc8] sm:$0xff]
    %v54 = vld [vmem:[%s1 + $0xd0] sm:$0xff]
    %v55 = vld [vmem:[%s1 + $0xd8] sm:$0xff]
    %v56 = vld [vmem:[%s1 + $0xe0] sm:$0xff]
    %v57 = vld [vmem:[%s1 + $0xe8] sm:$0xff]
    %v58 = vld [vmem:[%s1 + $0xf0] sm:$0xff]
    %v59 = vld [vmem:[%s1 + $0xf8] sm:$0xff]
    %v60 = vld [vmem:[%s2] sm:$0x3]
    %v62 = vlaneseq
    %v63 = vshrl.u32 %v62, 7
    %v64 = vsub.s32 0, %v63
    %v65 = vrot.slane %v60, %v64
    %v66 = vlaneseq
    %v67 = vshrl.u32 %v66, 7
    %v68 = vsub.s32 1, %v67
    %v69 = vrot.slane %v60, %v68
    %v104 = vunpack.c.l.b16 %v28
    %v105 = vunpack.c.h.b16 %v28
    %v106 = vunpack.c.l.b16 %v29
    %v107 = vunpack.c.h.b16 %v29
    %v108 = vunpack.c.l.b16 %v30
    %v109 = vunpack.c.h.b16 %v30
    %v110 = vunpack.c.l.b16 %v31
    %v111 = vunpack.c.h.b16 %v31
    %v112 = vunpack.c.l.b16 %v32
    %v113 = vunpack.c.h.b16 %v32
    %v114 = vunpack.c.l.b16 %v33
    %v115 = vunpack.c.h.b16 %v33
    %v116 = vunpack.c.l.b16 %v34
    %v117 = vunpack.c.h.b16 %v34
    %v118 = vunpack.c.l.b16 %v35
    %v119 = vunpack.c.h.b16 %v35
    %v120 = vunpack.c.l.b16 %v36
    %v121 = vunpack.c.h.b16 %v36
    %v122 = vunpack.c.l.b16 %v37
    %v123 = vunpack.c.h.b16 %v37
    %v124 = vunpack.c.l.b16 %v38
    %v125 = vunpack.c.h.b16 %v38
    %v126 = vunpack.c.l.b16 %v39
    %v127 = vunpack.c.h.b16 %v39
    %v128 = vunpack.c.l.b16 %v40
    %v129 = vunpack.c.h.b16 %v40
    %v130 = vunpack.c.l.b16 %v41
    %v131 = vunpack.c.h.b16 %v41
    %v132 = vunpack.c.l.b16 %v42
    %v133 = vunpack.c.h.b16 %v42
    %v134 = vunpack.c.l.b16 %v43
    %v135 = vunpack.c.h.b16 %v43
    %v136 = vunpack.c.l.b16 %v44
    %v137 = vunpack.c.h.b16 %v44
    %v138 = vunpack.c.l.b16 %v45
    %v139 = vunpack.c.h.b16 %v45
    %v140 = vunpack.c.l.b16 %v46
    %v141 = vunpack.c.h.b16 %v46
    %v142 = vunpack.c.l.b16 %v47
    %v143 = vunpack.c.h.b16 %v47
    %v144 = vunpack.c.l.b16 %v48
    %v145 = vunpack.c.h.b16 %v48
    %v146 = vunpack.c.l.b16 %v49
    %v147 = vunpack.c.h.b16 %v49
    %v148 = vunpack.c.l.b16 %v50
    %v149 = vunpack.c.h.b16 %v50
    %v150 = vunpack.c.l.b16 %v51
    %v151 = vunpack.c.h.b16 %v51
    %v152 = vunpack.c.l.b16 %v52
    %v153 = vunpack.c.h.b16 %v52
    %v154 = vunpack.c.l.b16 %v53
    %v155 = vunpack.c.h.b16 %v53
    %v156 = vunpack.c.l.b16 %v54
    %v157 = vunpack.c.h.b16 %v54
    %v158 = vunpack.c.l.b16 %v55
    %v159 = vunpack.c.h.b16 %v55
    %v160 = vunpack.c.l.b16 %v56
    %v161 = vunpack.c.h.b16 %v56
    %v162 = vunpack.c.l.b16 %v57
    %v163 = vunpack.c.h.b16 %v57
    %v164 = vunpack.c.l.b16 %v58
    %v165 = vunpack.c.h.b16 %v58
    %v166 = vunpack.c.l.b16 %v59
    %v167 = vunpack.c.h.b16 %v59
    %v168 = vpack.c.b16 %v106, %v104
    %v169 = vpack.c.b16 %v107, %v105
    %v170 = vpack.c.b16 %v110, %v108
    %v171 = vpack.c.b16 %v111, %v109
    %v172 = vpack.c.b16 %v114, %v112
    %v173 = vpack.c.b16 %v115, %v113
    %v174 = vpack.c.b16 %v118, %v116
    %v175 = vpack.c.b16 %v119, %v117
    %v176 = vpack.c.b16 %v122, %v120
    %v177 = vpack.c.b16 %v123, %v121
    %v178 = vpack.c.b16 %v126, %v124
    %v179 = vpack.c.b16 %v127, %v125
    %v180 = vpack.c.b16 %v130, %v128
    %v181 = vpack.c.b16 %v131, %v129
    %v182 = vpack.c.b16 %v134, %v132
    %v183 = vpack.c.b16 %v135, %v133
    %v184 = vpack.c.b16 %v138, %v136
    %v185 = vpack.c.b16 %v139, %v137
    %v186 = vpack.c.b16 %v142, %v140
    %v187 = vpack.c.b16 %v143, %v141
    %v188 = vpack.c.b16 %v146, %v144
    %v189 = vpack.c.b16 %v147, %v145
    %v190 = vpack.c.b16 %v150, %v148
    %v191 = vpack.c.b16 %v151, %v149
    %v192 = vpack.c.b16 %v154, %v152
    %v193 = vpack.c.b16 %v155, %v153
    %v194 = vpack.c.b16 %v158, %v156
    %v195 = vpack.c.b16 %v159, %v157
    %v196 = vpack.c.b16 %v162, %v160
    %v197 = vpack.c.b16 %v163, %v161
    %v198 = vpack.c.b16 %v166, %v164
    %v199 = vpack.c.b16 %v167, %v165
    %232 = vmatprep.subr.bf16.mxu0 %v169
    %233 = vmatpush1.bf16.msra.mxu0 %v168
    %234 = vmatprep.subr.bf16.mxu0 %v171
    %235 = vmatpush1.bf16.msra.mxu0 %v170
    %236 = vmatprep.subr.bf16.mxu0 %v173
    %237 = vmatpush1.bf16.msra.mxu0 %v172
    %238 = vmatprep.subr.bf16.mxu0 %v175
    %239 = vmatpush1.bf16.msra.mxu0 %v174
    %240 = vmatprep.subr.bf16.mxu0 %v177
    %241 = vmatpush1.bf16.msra.mxu0 %v176
    %242 = vmatprep.subr.bf16.mxu0 %v179
    %243 = vmatpush1.bf16.msra.mxu0 %v178
    %244 = vmatprep.subr.bf16.mxu0 %v181
    %245 = vmatpush1.bf16.msra.mxu0 %v180
    %246 = vmatprep.subr.bf16.mxu0 %v183
    %247 = vmatpush1.bf16.msra.mxu0 %v182
    %248 = vmatprep.subr.bf16.mxu0 %v185
    %249 = vmatpush1.bf16.msra.mxu0 %v184
    %250 = vmatprep.subr.bf16.mxu0 %v187
    %251 = vmatpush1.bf16.msra.mxu0 %v186
    %252 = vmatprep.subr.bf16.mxu0 %v189
    %253 = vmatpush1.bf16.msra.mxu0 %v188
    %254 = vmatprep.subr.bf16.mxu0 %v191
    %255 = vmatpush1.bf16.msra.mxu0 %v190
    %256 = vmatprep.subr.bf16.mxu0 %v193
    %257 = vmatpush1.bf16.msra.mxu0 %v192
    %258 = vmatprep.subr.bf16.mxu0 %v195
    %259 = vmatpush1.bf16.msra.mxu0 %v194
    %260 = vmatprep.subr.bf16.mxu0 %v197
    %261 = vmatpush1.bf16.msra.mxu0 %v196
    %262 = vmatprep.subr.bf16.mxu0 %v199
    %263 = vmatpush1.bf16.msra.mxu0 %v198
    %264 = vmatprep.mubr.bf16.mxu0 %v27
    %265 = vmatmul.mubr.bf16.gmra.mrb[0].mxu0 %v26
    %v266 = vpop.f32.mrb[0].mxu0
    %v267 = vadd.f32 %v65, %v266
    %v268 = vpop.f32.mrb[0].mxu0
    %v269 = vadd.f32 %v69, %v268
    %v270 = vpop.f32.mrb[0].mxu0
    %v271 = vadd.f32 %v65, %v270
    %v272 = vpop.f32.mrb[0].mxu0
    %v273 = vadd.f32 %v69, %v272
    %274 = vdwg.mxu0
    %v275 = vmul.f32 %v267, 0.5
    %v276 = vmul.f32 %v269, 0.5
    %v277 = vmul.f32 %v271, 0.5
    %v278 = vmul.f32 %v273, 0.5
    %v279 = vmul.f32 %v267, 0.70710677
    %v280 = vmul.f32 %v269, 0.70710677
    %v281 = vmul.f32 %v271, 0.70710677
    %v282 = vmul.f32 %v273, 0.70710677
    %v283 = verf.f32.pop %v279
    %v284 = verf.f32.pop %v280
    %v285 = verf.f32.pop %v281
    %v286 = verf.f32.pop %v282
    %v287 = vadd.f32 %v283, 1.0
    %v288 = vadd.f32 %v284, 1.0
    %v289 = vadd.f32 %v285, 1.0
    %v290 = vadd.f32 %v286, 1.0
    %v291 = vmul.f32 %v275, %v287
    %v292 = vmul.f32 %v276, %v288
    %v293 = vmul.f32 %v277, %v289
    %v294 = vmul.f32 %v278, %v290
    %v295 = vpack.c.bf16 %v293, %v291
    %v296 = vpack.c.bf16 %v294, %v292
    %v297 = vld [vmem:[%s3] sm:$0xf]
    %v298 = vld [vmem:[%s3 + $0x4] sm:$0xf]
    %v299 = vld [vmem:[%s3 + $0x8] sm:$0xf]
    %v300 = vld [vmem:[%s3 + $0xc] sm:$0xf]
    %v301 = vld [vmem:[%s3 + $0x10] sm:$0xf]
    %v302 = vld [vmem:[%s3 + $0x14] sm:$0xf]
    %v303 = vld [vmem:[%s3 + $0x18] sm:$0xf]
    %v304 = vld [vmem:[%s3 + $0x1c] sm:$0xf]
    %v305 = vld [vmem:[%s3 + $0x20] sm:$0xf]
    %v306 = vld [vmem:[%s3 + $0x24] sm:$0xf]
    %v307 = vld [vmem:[%s3 + $0x28] sm:$0xf]
    %v308 = vld [vmem:[%s3 + $0x2c] sm:$0xf]
    %v309 = vld [vmem:[%s3 + $0x30] sm:$0xf]
    %v310 = vld [vmem:[%s3 + $0x34] sm:$0xf]
    %v311 = vld [vmem:[%s3 + $0x38] sm:$0xf]
    %v312 = vld [vmem:[%s3 + $0x3c] sm:$0xf]
    %v313 = vld [vmem:[%s3 + $0x40] sm:$0xf]
    %v314 = vld [vmem:[%s3 + $0x44] sm:$0xf]
    %v315 = vld [vmem:[%s3 + $0x48] sm:$0xf]
    %v316 = vld [vmem:[%s3 + $0x4c] sm:$0xf]
    %v317 = vld [vmem:[%s3 + $0x50] sm:$0xf]
    %v318 = vld [vmem:[%s3 + $0x54] sm:$0xf]
    %v319 = vld [vmem:[%s3 + $0x58] sm:$0xf]
    %v320 = vld [vmem:[%s3 + $0x5c] sm:$0xf]
    %v321 = vld [vmem:[%s3 + $0x60] sm:$0xf]
    %v322 = vld [vmem:[%s3 + $0x64] sm:$0xf]
    %v323 = vld [vmem:[%s3 + $0x68] sm:$0xf]
    %v324 = vld [vmem:[%s3 + $0x6c] sm:$0xf]
    %v325 = vld [vmem:[%s3 + $0x70] sm:$0xf]
    %v326 = vld [vmem:[%s3 + $0x74] sm:$0xf]
    %v327 = vld [vmem:[%s3 + $0x78] sm:$0xf]
    %v328 = vld [vmem:[%s3 + $0x7c] sm:$0xf]
    %v329 = vld [vmem:[%s4] sm:$0x7]
    %v330 = vlaneseq
    %v331 = vshrl.u32 %v330, 7
    %v332 = vsub.s32 0, %v331
    %v333 = vrot.slane %v329, %v332
    %v366 = vunpack.c.l.b16 %v297
    %v367 = vunpack.c.l.b16 %v298
    %v368 = vunpack.c.l.b16 %v299
    %v369 = vunpack.c.l.b16 %v300
    %v370 = vunpack.c.l.b16 %v301
    %v371 = vunpack.c.l.b16 %v302
    %v372 = vunpack.c.l.b16 %v303
    %v373 = vunpack.c.l.b16 %v304
    %v374 = vunpack.c.l.b16 %v305
    %v375 = vunpack.c.l.b16 %v306
    %v376 = vunpack.c.l.b16 %v307
    %v377 = vunpack.c.l.b16 %v308
    %v378 = vunpack.c.l.b16 %v309
    %v379 = vunpack.c.l.b16 %v310
    %v380 = vunpack.c.l.b16 %v311
    %v381 = vunpack.c.l.b16 %v312
    %v382 = vunpack.c.l.b16 %v313
    %v383 = vunpack.c.l.b16 %v314
    %v384 = vunpack.c.l.b16 %v315
    %v385 = vunpack.c.l.b16 %v316
    %v386 = vunpack.c.l.b16 %v317
    %v387 = vunpack.c.l.b16 %v318
    %v388 = vunpack.c.l.b16 %v319
    %v389 = vunpack.c.l.b16 %v320
    %v390 = vunpack.c.l.b16 %v321
    %v391 = vunpack.c.l.b16 %v322
    %v392 = vunpack.c.l.b16 %v323
    %v393 = vunpack.c.l.b16 %v324
    %v394 = vunpack.c.l.b16 %v325
    %v395 = vunpack.c.l.b16 %v326
    %v396 = vunpack.c.l.b16 %v327
    %v397 = vunpack.c.l.b16 %v328
    %v398 = vpack.c.b16 %v367, %v366
    %v399 = vpack.c.b16 %v369, %v368
    %v400 = vpack.c.b16 %v371, %v370
    %v401 = vpack.c.b16 %v373, %v372
    %v402 = vpack.c.b16 %v375, %v374
    %v403 = vpack.c.b16 %v377, %v376
    %v404 = vpack.c.b16 %v379, %v378
    %v405 = vpack.c.b16 %v381, %v380
    %v406 = vpack.c.b16 %v383, %v382
    %v407 = vpack.c.b16 %v385, %v384
    %v408 = vpack.c.b16 %v387, %v386
    %v409 = vpack.c.b16 %v389, %v388
    %v410 = vpack.c.b16 %v391, %v390
    %v411 = vpack.c.b16 %v393, %v392
    %v412 = vpack.c.b16 %v395, %v394
    %v413 = vpack.c.b16 %v397, %v396
    %430 = vmatprep.subr.bf16.mxu0 0
    %431 = vmatpush1.bf16.msra.mxu0 %v398
    %432 = vmatprep.subr.bf16.mxu0 0
    %433 = vmatpush1.bf16.msra.mxu0 %v399
    %434 = vmatprep.subr.bf16.mxu0 0
    %435 = vmatpush1.bf16.msra.mxu0 %v400
    %436 = vmatprep.subr.bf16.mxu0 0
    %437 = vmatpush1.bf16.msra.mxu0 %v401
    %438 = vmatprep.subr.bf16.mxu0 0
    %439 = vmatpush1.bf16.msra.mxu0 %v402
    %440 = vmatprep.subr.bf16.mxu0 0
    %441 = vmatpush1.bf16.msra.mxu0 %v403
    %442 = vmatprep.subr.bf16.mxu0 0
    %443 = vmatpush1.bf16.msra.mxu0 %v404
    %444 = vmatprep.subr.bf16.mxu0 0
    %445 = vmatpush1.bf16.msra.mxu0 %v405
    %446 = vmatprep.subr.bf16.mxu0 0
    %447 = vmatpush1.bf16.msra.mxu0 %v406
    %448 = vmatprep.subr.bf16.mxu0 0
    %449 = vmatpush1.bf16.msra.mxu0 %v407
    %450 = vmatprep.subr.bf16.mxu0 0
    %451 = vmatpush1.bf16.msra.mxu0 %v408
    %452 = vmatprep.subr.bf16.mxu0 0
    %453 = vmatpush1.bf16.msra.mxu0 %v409
    %454 = vmatprep.subr.bf16.mxu0 0
    %455 = vmatpush1.bf16.msra.mxu0 %v410
    %456 = vmatprep.subr.bf16.mxu0 0
    %457 = vmatpush1.bf16.msra.mxu0 %v411
    %458 = vmatprep.subr.bf16.mxu0 0
    %459 = vmatpush1.bf16.msra.mxu0 %v412
    %460 = vmatprep.subr.bf16.mxu0 0
    %461 = vmatpush1.bf16.msra.mxu0 %v413
    %462 = vmatprep.mubr.bf16.mxu0 %v296
    %463 = vmatmul.mubr.bf16.gmra.mrb[0].mxu0 %v295
    %v464 = vpop.f32.mrb[0].mxu0
    %v465 = vadd.f32 %v333, %v464
    %v466 = vpop.f32.mrb[0].mxu0
    %v467 = vpop.f32.mrb[0].mxu0
    %v468 = vadd.f32 %v333, %v467
    %v469 = vpop.f32.mrb[0].mxu0
    %470 = vdwg.mxu0
    %471 = vadd.xlane.f32.xlu0 %v465
    %v472 = vpop.xlane.xlu0 %471
    %473 = vadd.xlane.f32.xlu0 %v468
    %v474 = vpop.xlane.xlu0 %473
    %v475 = vmul.f32 %v472, 0.0078125
    %v476 = vmul.f32 %v474, 0.0078125
    %v477 = vsub.f32 %v465, %v475
    %v478 = vsub.f32 %v468, %v476
    %v479 = vmul.f32 %v477, %v477
    %v480 = vmul.f32 %v478, %v478
    %481 = vadd.xlane.f32.xlu0 %v479
    %v482 = vpop.xlane.xlu0 %481
    %483 = vadd.xlane.f32.xlu0 %v480
    %v484 = vpop.xlane.xlu0 %483
    %v485 = vmul.f32 %v482, 0.0078125
    %v486 = vmul.f32 %v484, 0.0078125
    %v487 = vadd.f32 %v485, 1e-05
    %v488 = vadd.f32 %v486, 1e-05
    %v489 = vrsqrt.pop %v487
    %v490 = vrsqrt.pop %v488
    %v491 = vmul.f32 %v477, %v489
    %v492 = vmul.f32 %v478, %v490
    %v493 = vlaneseq
    %v494 = vshrl.u32 %v493, 7
    %v495 = vsub.s32 1, %v494
    %v496 = vrot.slane %v329, %v495
    %v497 = vmul.f32 %v491, %v496
    %v498 = vmul.f32 %v492, %v496
    %v499 = vlaneseq
    %v500 = vshrl.u32 %v499, 7
    %v501 = vsub.s32 2, %v500
    %v502 = vrot.slane %v329, %v501
    %v503 = vadd.f32 %v497, %v502
    %v504 = vadd.f32 %v498, %v502
    %505 = vst [vmem:[#allocation2] sm:$0xff] %v503
    %506 = vst [vmem:[#allocation2 + $0x8] sm:$0xff] %v504
    // Predicated region
    $region22: #{_mlp_proj_impl.1} parent=1 // pred_check
      _
    $region23: #{_mlp_proj_impl.1} parent=1 // pred_check_branch
      %508 = sbr.rel (0) target = $region25
    $region24: #{_mlp_proj_impl.1} parent=1 // pred_region
      %s510 = ssub.s32 256, 256
      %511 = vsyncadd [#allocation3], %s510
      %s512 = sshll.u32 [#allocation2], 4
      %s513 = int_to_ptr.vmem [resolvable:$true] %s512
      %518 = dma.vmem_to_hbm [thread:$0]  %s513, 256, %s5, [#allocation3], 128, 128, 8
    $region25: #{_mlp_proj_impl.1} parent=1 // pred_fallthru
      _
    // Predicated region
    $region26: #{_mlp_proj_impl.1} parent=1 // pred_check
      _
    $region27: #{_mlp_proj_impl.1} parent=1 // pred_check_branch
      %520 = sbr.rel (0) target = $region29
    $region28: #{_mlp_proj_impl.1} parent=1 // pred_region
      %521 = dma.done [#allocation3], 256
    $region29: #{_mlp_proj_impl.1} parent=1 // pred_fallthru
      _
    %522 = vsyncpa [#allocation3], 1

</llo_original>
